<compile_context>
chip_gen: v7x
topology: tpu7x:2x2x1
jax: 0.10.0
libtpu: 0.0.40
codegen_flags: <defaults>
</compile_context>

<pallas_src>
import functools

import jax
import jax.numpy as jnp
from jax.experimental import pallas as pl
from jax.experimental.pallas import tpu as pltpu


def _round_up(x, m):
    return (x + m - 1) // m * m


def _head_kernel(hs_ref, wc_ref, bc_ref, lab_ref, logits_ref, loss_ref,
                 *, m_total, tm):
    """One grid step processes a tile of `tm` tokens (lane-dense layout).

    hs_ref:     (tm, HL)  f32/bf16  hidden states (native stack(dim=3) view)
    wc_ref:     (3, HL)   f32/bf16  fused pooler+classifier weight (lane-dense)
    bc_ref:     (3, 1)    f32       fused bias
    lab_ref:    (1, tm)   i32       labels (<0 == ignored / padding)
    logits_ref: (3, tm)   f32       logits tile (lane-dense)
    loss_ref:   (1, tm)   f32       per-token CE (0 for ignored / OOB rows)
    """
    # ---- fused hs_pooler + classifier: (3,HL) x (tm,HL)^T -> (3,tm) on MXU,
    #      f32 accumulation, result is lane-dense -------------------------------
    logits = jax.lax.dot_general(
        wc_ref[...], hs_ref[...],
        dimension_numbers=(((1,), (1,)), ((), ())),
        preferred_element_type=jnp.float32)
    logits = logits + bc_ref[...]                                # (3, tm)
    logits_ref[...] = logits

    # ---- per-token cross-entropy, vectorized along lanes ----------------------
    lab = lab_ref[...]                                           # (1, tm) i32
    m = jnp.max(logits, axis=0, keepdims=True)                   # (1, tm)
    lse = m + jnp.log(jnp.sum(jnp.exp(logits - m), axis=0, keepdims=True))
    cls_ids = jax.lax.broadcasted_iota(jnp.int32, logits.shape, 0)   # (3, tm)
    onehot = (cls_ids == lab).astype(jnp.float32)
    correct = jnp.sum(logits * onehot, axis=0, keepdims=True)    # (1, tm)

    # mask ignored labels AND rows past M in the (possibly partial) tail block
    col = jax.lax.broadcasted_iota(jnp.int32, lab.shape, 1)      # (1, tm)
    row_id = pl.program_id(0) * tm + col
    keep = (lab >= 0) & (row_id < m_total)
    loss_ref[...] = jnp.where(keep, lse - correct, 0.0)


def _choose_tm(M, HL, itemsize, tm_default):
    """Pick the token-tile size from a full VMEM accounting (all buffers)."""
    HLp = _round_up(HL, 128)
    # bytes per token row, over all double-buffered tm-scaled blocks:
    #   hs tile (tm, HLp) + labels/logits/loss as (8-sublane-padded, tm) f32/i32
    per_row = 2 * HLp * itemsize + 2 * 3 * 8 * 4
    # tm-independent blocks: fused weight (3->8, HLp) + bias, double-buffered
    fixed = 2 * 8 * HLp * itemsize + 2 * 8 * 128 * 4
    budget = 40 * 1024 * 1024                     # <= 48 MiB limit, v7x-safe
    tm_cap = max(128, (budget - fixed) // per_row)
    # keep >= 2 grid steps when M is large enough (v7x megacore uses both TCs)
    half = _round_up(pl.cdiv(M, 2), 128)
    tm = min(int(tm_default), int(tm_cap), int(half))
    tm = max(128, (tm // 128) * 128)
    if tm >= M:
        return M        # single block; block dim == full array dim is always legal
    return tm


@functools.partial(jax.jit, static_argnames=("tm",))
def model13_head(hs_bshl, w_pool, b_pool, w_cls, b_cls, labels, *, tm=4096):
    """hs_bshl: (B, S, H, L) stacked hidden states (torch.stack(hs, dim=3) layout),
    f32 or bf16 (bf16 streaming recommended: halves HBM traffic, f32 accumulation
    is kept).  w_pool: (L,), b_pool: (1,), w_cls: (3, H), b_cls: (3,),
    labels: (B, S) int (label < 0 is ignored, like CrossEntropyLoss(-100)).
    Returns (logits (B, S, 3) f32, mean CE loss ()).
    """
    B, S, H, L = hs_bshl.shape
    M = B * S
    HL = H * L
    stream_dtype = hs_bshl.dtype
    itemsize = jnp.dtype(stream_dtype).itemsize

    # ---- fuse the two Linears into one lane-dense weight/bias (tiny) ----------
    w_pool_f = w_pool.astype(jnp.float32)
    w_cls_f = w_cls.astype(jnp.float32)
    # W_comb[c, h*L + l] = w_cls[c, h] * w_pool[l]
    w_comb = jnp.einsum("l,ch->chl", w_pool_f, w_cls_f).reshape(3, HL)
    w_comb = w_comb.astype(stream_dtype)          # match MXU streaming dtype
    b_comb = (b_cls.astype(jnp.float32)
              + b_pool.astype(jnp.float32)[0] * jnp.sum(w_cls_f, axis=1))
    b_comb = b_comb.reshape(3, 1)

    # ---- native layout: free reshape, NO transpose, NO padding ----------------
    hs = hs_bshl.reshape(M, HL)                   # view of stack(dim=3) layout
    lab = labels.reshape(1, M).astype(jnp.int32)  # lane-dense labels

    tm_eff = _choose_tm(M, HL, itemsize, tm)
    grid = (pl.cdiv(M, tm_eff),)                  # partial tail block allowed

    kernel = functools.partial(_head_kernel, m_total=M, tm=tm_eff)
    logits_t, loss_tok = pl.pallas_call(
        kernel,
        out_shape=(
            jax.ShapeDtypeStruct((3, M), jnp.float32),   # lane-dense logits
            jax.ShapeDtypeStruct((1, M), jnp.float32),   # lane-dense per-tok CE
        ),
        grid_spec=pltpu.PrefetchScalarGridSpec(
            num_scalar_prefetch=0,
            grid=grid,
            in_specs=[
                pl.BlockSpec((tm_eff, HL), lambda i: (i, 0)),  # hs tile
                pl.BlockSpec((3, HL), lambda i: (0, 0)),       # fused weight
                pl.BlockSpec((3, 1), lambda i: (0, 0)),        # fused bias
                pl.BlockSpec((1, tm_eff), lambda i: (0, i)),   # labels
            ],
            out_specs=[
                pl.BlockSpec((3, tm_eff), lambda i: (0, i)),   # logits
                pl.BlockSpec((1, tm_eff), lambda i: (0, i)),   # per-token CE
            ],
        ),
        compiler_params=pltpu.CompilerParams(
            dimension_semantics=("parallel",),   # no cross-tile dependency
            vmem_limit_bytes=48 * 1024 * 1024,   # within v7x's 64 MiB per-TC
        ),
    )(hs, w_comb, b_comb, lab)

    logits = logits_t.T.reshape(B, S, 3)          # tiny wrapper-side transpose
    n_valid = jnp.maximum(
        jnp.sum((labels.reshape(-1) >= 0).astype(jnp.float32)), 1.0)
    loss = jnp.sum(loss_tok) / n_valid            # reduction='mean'
    return logits, loss


def _reference(hs_bshl, w_pool, b_pool, w_cls, b_cls, labels):
    """Pure-JAX reference mirroring Model13.forward (eval mode)."""
    seq = jnp.einsum("bshl,l->bsh", hs_bshl.astype(jnp.float32), w_pool) + b_pool[0]
    logits = jnp.einsum("bsh,ch->bsc", seq, w_cls) + b_cls
    flat = logits.reshape(-1, 3)
    lab = labels.reshape(-1)
    valid = lab >= 0
    lse = jax.nn.logsumexp(flat, axis=-1)
    correct = jnp.take_along_axis(flat, jnp.maximum(lab, 0).reshape(-1, 1), axis=1)[:, 0]
    per_tok = jnp.where(valid, lse - correct, 0.0)
    loss = jnp.sum(per_tok) / jnp.maximum(jnp.sum(valid.astype(jnp.float32)), 1.0)
    return logits, loss


if __name__ == "__main__":
    # Small shapes consistent with the module's forward.
    B, S, H, L = 2, 8, 32, 4      # batch, seq len, hidden size, num_hidden_layers

    key = jax.random.PRNGKey(0)
    k_hs, k_wp, k_bp, k_wc, k_bc, k_lab = jax.random.split(key, 6)

    # "Backbone" hidden states, already stacked like torch.stack(hs, dim=3).
    hs_bshl = jax.random.normal(k_hs, (B, S, H, L), dtype=jnp.float32)

    # Deterministic parameter init (shapes from the module's __init__).
    w_pool = jax.random.normal(k_wp, (L,), dtype=jnp.float32) * 0.1   # Linear(L, 1).weight
    b_pool = jax.random.normal(k_bp, (1,), dtype=jnp.float32) * 0.1   # Linear(L, 1).bias
    w_cls = jax.random.normal(k_wc, (3, H), dtype=jnp.float32) * 0.1  # Linear(H, 3).weight
    b_cls = jax.random.normal(k_bc, (3,), dtype=jnp.float32) * 0.1    # Linear(H, 3).bias
    labels = jax.random.randint(k_lab, (B, S), 0, 3, dtype=jnp.int32)

    # ---- Test 1: f32 streaming -----------------------------------------------
    logits, loss = model13_head(hs_bshl, w_pool, b_pool, w_cls, b_cls, labels)
    logits, loss = jax.block_until_ready((logits, loss))
    ref_logits, ref_loss = _reference(hs_bshl, w_pool, b_pool, w_cls, b_cls, labels)
    assert jnp.allclose(logits, ref_logits, rtol=1e-4, atol=1e-4)
    assert jnp.allclose(loss, ref_loss, rtol=1e-4, atol=1e-4)

    # ---- Test 2: bf16 streaming (f32 accumulation), looser tolerance ---------
    logits_bf, loss_bf = model13_head(
        hs_bshl.astype(jnp.bfloat16), w_pool, b_pool, w_cls, b_cls, labels)
    logits_bf, loss_bf = jax.block_until_ready((logits_bf, loss_bf))
    assert jnp.allclose(logits_bf, ref_logits, rtol=5e-2, atol=5e-2)
    assert jnp.allclose(loss_bf, ref_loss, rtol=5e-2, atol=5e-2)

    # ---- Test 3: ragged M (no HBM pad; partial/full-dim block path) +
    #      ignored labels (PyTorch -100) ---------------------------------------
    B2, S2 = 2, 11
    k_hs2, k_lab2 = jax.random.split(jax.random.PRNGKey(1), 2)
    hs2 = jax.random.normal(k_hs2, (B2, S2, H, L), dtype=jnp.float32)
    labels2 = jax.random.randint(k_lab2, (B2, S2), 0, 3, dtype=jnp.int32)
    labels2 = labels2.at[0, 3].set(-100).at[1, 7].set(-100)
    logits2, loss2 = model13_head(hs2, w_pool, b_pool, w_cls, b_cls, labels2)
    logits2, loss2 = jax.block_until_ready((logits2, loss2))
    ref_logits2, ref_loss2 = _reference(hs2, w_pool, b_pool, w_cls, b_cls, labels2)
    assert jnp.allclose(logits2, ref_logits2, rtol=1e-4, atol=1e-4)
    assert jnp.allclose(loss2, ref_loss2, rtol=1e-4, atol=1e-4)

    print("KERNEL_OK")
</pallas_src>

<mosaic_0001>
module attributes {stable_mosaic.version = 11 : i64} {
  func.func @_head_kernel(%arg0: i32, %arg1: memref<16x128xf32, #tpu.memory_space<vmem>>, %arg2: memref<3x128xf32, #tpu.memory_space<vmem>>, %arg3: memref<3x1xf32, #tpu.memory_space<vmem>>, %arg4: memref<1x16xi32, #tpu.memory_space<vmem>>, %arg5: memref<3x16xf32, #tpu.memory_space<vmem>>, %arg6: memref<1x16xf32, #tpu.memory_space<vmem>>) attributes {dimension_semantics = [#tpu.dimension_semantics<parallel>], iteration_bounds = array<i64: 1>, scalar_prefetch = 0 : i64, scratch_operands = 0 : i64, tpu.core_type = #tpu.core_type<tc>, window_params = [{transform_indices = @transform_0, window_bounds = array<i64: 16, 128>}, {pipeline_mode = #tpu.pipeline_mode<synchronous>, transform_indices = @transform_1, window_bounds = array<i64: 3, 128>}, {pipeline_mode = #tpu.pipeline_mode<synchronous>, transform_indices = @transform_2, window_bounds = array<i64: 3, 1>}, {transform_indices = @transform_3, window_bounds = array<i64: 1, 16>}, {transform_indices = @transform_4, window_bounds = array<i64: 3, 16>}, {transform_indices = @transform_5, window_bounds = array<i64: 1, 16>}]} {
    %c0 = arith.constant 0 : index
    %c0_0 = arith.constant 0 : index
    %0 = vector.load %arg2[%c0, %c0_0] : memref<3x128xf32, #tpu.memory_space<vmem>>, vector<3x128xf32>
    %c0_1 = arith.constant 0 : index
    %c0_2 = arith.constant 0 : index
    %1 = vector.load %arg1[%c0_1, %c0_2] : memref<16x128xf32, #tpu.memory_space<vmem>>, vector<16x128xf32>
    %cst = arith.constant dense<0.000000e+00> : vector<3x16xf32>
    %2 = tpu.matmul %0, %1, %cst {dimension_numbers = #tpu.dot_dimension_numbers<[1], [1], [0], [0], [0, 0, 1, 0], [], []>} : vector<3x128xf32>, vector<16x128xf32>, vector<3x16xf32> -> vector<3x16xf32>
    %c0_3 = arith.constant 0 : index
    %c0_4 = arith.constant 0 : index
    %3 = vector.load %arg3[%c0_3, %c0_4] : memref<3x1xf32, #tpu.memory_space<vmem>>, vector<3x1xf32>
    %4 = vector.broadcast %3 : vector<3x1xf32> to vector<3x16xf32>
    %5 = arith.addf %2, %4 : vector<3x16xf32>
    %c0_5 = arith.constant 0 : index
    %c0_6 = arith.constant 0 : index
    %6 = vector.load %arg5[%c0_5, %c0_6] : memref<3x16xf32, #tpu.memory_space<vmem>>, vector<3x16xf32>
    tpu.vector_store %arg5[%c0_5, %c0_6], %5 {strides = array<i32>} : memref<3x16xf32, #tpu.memory_space<vmem>>, vector<3x16xf32>,
    %c0_7 = arith.constant 0 : index
    %c0_8 = arith.constant 0 : index
    %7 = vector.load %arg4[%c0_7, %c0_8] : memref<1x16xi32, #tpu.memory_space<vmem>>, vector<1x16xi32>
    %cst_9 = arith.constant dense<0xFF800000> : vector<16xf32>
    %8 = vector.multi_reduction <maximumf>, %5, %cst_9 [0] : vector<3x16xf32> to vector<16xf32>
    %9 = vector.shape_cast %8 : vector<16xf32> to vector<1x16xf32>
    %10 = vector.broadcast %9 : vector<1x16xf32> to vector<3x16xf32>
    %11 = arith.subf %5, %10 : vector<3x16xf32>
    %12 = math.exp %11 : vector<3x16xf32>
    %cst_10 = arith.constant dense<0.000000e+00> : vector<16xf32>
    %13 = vector.multi_reduction <add>, %12, %cst_10 [0] : vector<3x16xf32> to vector<16xf32>
    %14 = vector.shape_cast %13 : vector<16xf32> to vector<1x16xf32>
    %15 = math.log %14 : vector<1x16xf32>
    %16 = arith.addf %9, %15 : vector<1x16xf32>
    %17 = tpu.iota {dimensions = array<i32: 0>} : vector<3x16xi32>
    %18 = vector.broadcast %7 : vector<1x16xi32> to vector<3x16xi32>
    %19 = arith.cmpi eq, %17, %18 : vector<3x16xi32>
    %20 = arith.extui %19 : vector<3x16xi1> to vector<3x16xi32>
    %21 = arith.sitofp %20 : vector<3x16xi32> to vector<3x16xf32>
    %22 = arith.mulf %5, %21 : vector<3x16xf32>
    %cst_11 = arith.constant dense<0.000000e+00> : vector<16xf32>
    %23 = vector.multi_reduction <add>, %22, %cst_11 [0] : vector<3x16xf32> to vector<16xf32>
    %24 = vector.shape_cast %23 : vector<16xf32> to vector<1x16xf32>
    %25 = tpu.iota {dimensions = array<i32: 1>} : vector<1x16xi32>
    %c16_i32 = arith.constant 16 : i32
    %26 = arith.muli %arg0, %c16_i32 : i32
    %27 = vector.broadcast %26 : i32 to vector<1x16xi32>
    %28 = arith.addi %27, %25 : vector<1x16xi32>
    %c0_i32 = arith.constant 0 : i32
    %29 = vector.broadcast %c0_i32 : i32 to vector<1x16xi32>
    %30 = arith.cmpi sge, %7, %29 : vector<1x16xi32>
    %c16_i32_12 = arith.constant 16 : i32
    %31 = vector.broadcast %c16_i32_12 : i32 to vector<1x16xi32>
    %32 = arith.cmpi slt, %28, %31 : vector<1x16xi32>
    %33 = arith.andi %30, %32 : vector<1x16xi1>
    %34 = arith.subf %16, %24 : vector<1x16xf32>
    %cst_13 = arith.constant 0.000000e+00 : f32
    %35 = vector.broadcast %cst_13 : f32 to vector<1x16xf32>
    %36 = arith.select %33, %34, %35 : vector<1x16xi1>, vector<1x16xf32>
    %c0_14 = arith.constant 0 : index
    %c0_15 = arith.constant 0 : index
    %37 = vector.load %arg6[%c0_14, %c0_15] : memref<1x16xf32, #tpu.memory_space<vmem>>, vector<1x16xf32>
    tpu.vector_store %arg6[%c0_14, %c0_15], %36 {strides = array<i32>} : memref<1x16xf32, #tpu.memory_space<vmem>>, vector<1x16xf32>,
    return
  }
  func.func @transform_0(%arg0: i32) -> (i32, i32) {
    %c0_i32 = arith.constant 0 : i32
    %c0_i32_0 = arith.constant 0 : i32
    return %arg0, %c0_i32 : i32, i32
  }
  func.func @transform_1(%arg0: i32) -> (i32, i32) {
    %c0_i32 = arith.constant 0 : i32
    %c0_i32_0 = arith.constant 0 : i32
    %c0_i32_1 = arith.constant 0 : i32
    return %c0_i32, %c0_i32_0 : i32, i32
  }
  func.func @transform_2(%arg0: i32) -> (i32, i32) {
    %c0_i32 = arith.constant 0 : i32
    %c0_i32_0 = arith.constant 0 : i32
    %c0_i32_1 = arith.constant 0 : i32
    return %c0_i32, %c0_i32_0 : i32, i32
  }
  func.func @transform_3(%arg0: i32) -> (i32, i32) {
    %c0_i32 = arith.constant 0 : i32
    %c0_i32_0 = arith.constant 0 : i32
    return %c0_i32, %arg0 : i32, i32
  }
  func.func @transform_4(%arg0: i32) -> (i32, i32) {
    %c0_i32 = arith.constant 0 : i32
    %c0_i32_0 = arith.constant 0 : i32
    return %c0_i32, %arg0 : i32, i32
  }
  func.func @transform_5(%arg0: i32) -> (i32, i32) {
    %c0_i32 = arith.constant 0 : i32
    %c0_i32_0 = arith.constant 0 : i32
    return %c0_i32, %arg0 : i32, i32
  }
}

</mosaic_0001>

<llo_original>
// kernel: model13_head.1
$region0: #{model13_head.1}
  #allocation0 [shape = 'u32[]', space=smem, size = 0x4, offset = 0x4, fixed_abs, tag = 'smem constant byte address 0x4 - core index']
  #allocation1 [shape = 'u32[144,128]{1,0:T(1,128)}', space=vmem, size = 0x12000, scoped, tag = 'internal scratch']
  %s0 = inlined_call_operand.vmem [shape: f32[16,128], index: 0, kind: input, shape index: {}]
  %s1 = inlined_call_operand.vmem [shape: f32[3,128], index: 1, kind: input, shape index: {}]
  %s2 = inlined_call_operand.vmem [shape: f32[3,1], index: 2, kind: input, shape index: {}]
  %s3 = inlined_call_operand.vmem [shape: s32[1,16], index: 3, kind: input, shape index: {}]
  %s4 = inlined_call_operand.vmem [shape: f32[3,16], index: 4, kind: output, shape index: {0}]
  %s5 = inlined_call_operand.vmem [shape: f32[1,16], index: 5, kind: output, shape index: {1}]
  %6 = xla_tuple %s4, %s5
  %s7 = sld [smem:[#allocation0]]
  $region34: #{model13_head.1} parent=0
    _
  %s9 = ssub.s32 1, %s7
  %s10 = scalar_select 0, %s9, %s7
  // Predicated region
  $region2: #{model13_head.1} parent=0 // pred_check
    _
  $region3: #{model13_head.1} parent=0 // pred_check_branch
    %12 = sbr.rel (0) target = $region5
  $region4: #{model13_head.1} parent=0 // pred_region
    _
  $region5: #{model13_head.1} parent=0 // pred_fallthru
    _
  // Predicated region
  $region6: #{model13_head.1} parent=0 // pred_check
    _
  $region7: #{model13_head.1} parent=0 // pred_check_branch
    %14 = sbr.rel (0) target = $region9
  $region8: #{model13_head.1} parent=0 // pred_region
    _
  $region9: #{model13_head.1} parent=0 // pred_fallthru
    _
  // Predicated region
  $region10: #{model13_head.1} parent=0 // pred_check
    _
  $region11: #{model13_head.1} parent=0 // pred_check_branch
    %16 = sbr.rel (0) target = $region13
  $region12: #{model13_head.1} parent=0 // pred_region
    _
  $region13: #{model13_head.1} parent=0 // pred_fallthru
    _
  // Predicated region
  $region14: #{model13_head.1} parent=0 // pred_check
    _
  $region15: #{model13_head.1} parent=0 // pred_check_branch
    %18 = sbr.rel (0) target = $region17
  $region16: #{model13_head.1} parent=0 // pred_region
    _
  $region17: #{model13_head.1} parent=0 // pred_fallthru
    _
  %v19 = vld [vmem:[%s1] sm:$0x7]
  %v20 = vld [vmem:[%s0] sm:$0xff]
  %v21 = vld [vmem:[%s0 + $0x8] sm:$0xff]
  %v22 = vld [vmem:[%s2] sm:$0x7]
  %24 = vset.pattern.permute.xlu0 0
  %25 = vperm.xlu0 %24, %v22
  %v26 = vpop.permute.xlu0 %25
  %28 = vmatprep.subr.mxu0 0.0
  %29 = vmatpush1.xpose.msra.mxu0 %v20
  %30 = vmatprep.subr.mxu0 0.0
  %31 = vmatpush1.xpose.msra.mxu0 %v21
  %32 = vmatprep.subr.mxu0 0.0
  %33 = vmatpush1.xpose.msra.mxu0 0.0
  %34 = vmatprep.subr.mxu0 0.0
  %35 = vmatpush1.xpose.msra.mxu0 0.0
  %36 = vmatprep.subr.mxu0 0.0
  %37 = vmatpush1.xpose.msra.mxu0 0.0
  %38 = vmatprep.subr.mxu0 0.0
  %39 = vmatpush1.xpose.msra.mxu0 0.0
  %40 = vmatprep.subr.mxu0 0.0
  %41 = vmatpush1.xpose.msra.mxu0 0.0
  %42 = vmatprep.subr.mxu0 0.0
  %43 = vmatpush1.xpose.msra.mxu0 0.0
  %44 = vmatprep.subr.mxu0 0.0
  %45 = vmatpush1.xpose.msra.mxu0 0.0
  %46 = vmatprep.subr.mxu0 0.0
  %47 = vmatpush1.xpose.msra.mxu0 0.0
  %48 = vmatprep.subr.mxu0 0.0
  %49 = vmatpush1.xpose.msra.mxu0 0.0
  %50 = vmatprep.subr.mxu0 0.0
  %51 = vmatpush1.xpose.msra.mxu0 0.0
  %52 = vmatprep.subr.mxu0 0.0
  %53 = vmatpush1.xpose.msra.mxu0 0.0
  %54 = vmatprep.subr.mxu0 0.0
  %55 = vmatpush1.xpose.msra.mxu0 0.0
  %56 = vmatprep.subr.mxu0 0.0
  %57 = vmatpush1.xpose.msra.mxu0 0.0
  %58 = vmatprep.subr.mxu0 0.0
  %59 = vmatpush1.xpose.msra.mxu0 0.0
  %60 = vmatprep.subr.mxu0 0.0
  %61 = vmatpush1.xpose.msra.mxu0 0.0
  %62 = vmatprep.subr.mxu0 0.0
  %63 = vmatpush1.xpose.msra.mxu0 0.0
  %64 = vmatprep.subr.mxu0 0.0
  %65 = vmatpush1.xpose.msra.mxu0 0.0
  %66 = vmatprep.subr.mxu0 0.0
  %67 = vmatpush1.xpose.msra.mxu0 0.0
  %68 = vmatprep.subr.mxu0 0.0
  %69 = vmatpush1.xpose.msra.mxu0 0.0
  %70 = vmatprep.subr.mxu0 0.0
  %71 = vmatpush1.xpose.msra.mxu0 0.0
  %72 = vmatprep.subr.mxu0 0.0
  %73 = vmatpush1.xpose.msra.mxu0 0.0
  %74 = vmatprep.subr.mxu0 0.0
  %75 = vmatpush1.xpose.msra.mxu0 0.0
  %76 = vmatprep.subr.mxu0 0.0
  %77 = vmatpush1.xpose.msra.mxu0 0.0
  %78 = vmatprep.subr.mxu0 0.0
  %79 = vmatpush1.xpose.msra.mxu0 0.0
  %80 = vmatprep.subr.mxu0 0.0
  %81 = vmatpush1.xpose.msra.mxu0 0.0
  %82 = vmatprep.subr.mxu0 0.0
  %83 = vmatpush1.xpose.msra.mxu0 0.0
  %84 = vmatprep.subr.mxu0 0.0
  %85 = vmatpush1.xpose.msra.mxu0 0.0
  %86 = vmatprep.subr.mxu0 0.0
  %87 = vmatpush1.xpose.msra.mxu0 0.0
  %88 = vmatprep.subr.mxu0 0.0
  %89 = vmatpush1.xpose.msra.mxu0 0.0
  %90 = vmatprep.subr.mxu0 0.0
  %91 = vmatpush1.xpose.msra.mxu0 0.0
  %92 = vmatprep.mubr.f32.mxu0 0.0
  %93 = vmatmul.mubr.f32.gmra.mrb[0].mxu0 %v19
  %v94 = vpop.f32.mrb[0].mxu0
  %v95 = vadd.f32 %v26, %v94
  %v96 = vpop.f32.mrb[0].mxu0
  %97 = vdwg.mxu0
  %vm98 = vcmask 124928
  %99 = vst.msk [vmem:[%s4] sm:$0x7] %vm98, %v95
  %v100 = vld [vmem:[%s3] sm:$0x1]
  %v101 = vsel %vm98, %v95, -inf
  %v102 = vrot.slane %v101, 4
  %v103 = vmax.f32 %v101, %v102
  %v104 = vrot.slane %v103, 2
  %v105 = vmax.f32 %v103, %v104
  %v106 = vrot.slane %v105, 1
  %v107 = vmax.f32 %v105, %v106
  %v108 = vsub.f32 %v95, %v107
  %v109 = vmul.f32 %v108, 1.442695
  %v110 = vpow.pop %v109
  %v111 = vsel %vm98, %v110, 0.0
  %v112 = vrot.slane %v111, 4
  %v113 = vadd.f32 %v111, %v112
  %v114 = vrot.slane %v113, 2
  %v115 = vadd.f32 %v113, %v114
  %v116 = vrot.slane %v115, 1
  %v117 = vadd.f32 %v115, %v116
  %v118 = vlog2.pop %v117
  %v119 = vmul.f32 %v118, 0.6931472
  %v120 = vadd.f32 %v107, %v119
  %v121 = vlaneseq
  %v122 = vshrl.u32 %v121, 7
  %v123 = vlaneseq
  %v124 = vshrl.u32 %v123, 7
  %v125 = vsub.s32 0, %v124
  %v126 = vrot.slane %v100, %v125
  %vm127 = vcmp.eq.s32.totalorder %v122, %v126
  %v128 = vsel %vm127, 1, 0
  %v129 = vcvt.s32.f32 %v128
  %v130 = vmul.f32 %v95, %v129
  %v131 = vsel %vm98, %v130, 0.0
  %v132 = vrot.slane %v131, 4
  %v133 = vadd.f32 %v131, %v132
  %v134 = vrot.slane %v133, 2
  %v135 = vadd.f32 %v133, %v134
  %v136 = vrot.slane %v135, 1
  %v137 = vadd.f32 %v135, %v136
  %v138 = vlaneseq
  %v139 = vand.u32 %v138, 127
  %s140 = smul.u32 0, 16
  %v141 = vstv %s140
  %v142 = vadd.s32 %v141, %v139
  %vm143 = vcmp.ge.s32.totalorder %v100, 0
  %vm144 = vcmp.lt.s32.totalorder %v142, 16
  %vm145 = vmand %vm143, %vm144
  %v146 = vsub.f32 %v120, %v137
  %v147 = vsel %vm145, %v146, 0.0
  %vm148 = vcmask 122880
  %149 = vst.msk [vmem:[%s5] sm:$0x1] %vm148, %v147
  // Predicated region
  $region18: #{model13_head.1} parent=0 // pred_check
    _
  $region19: #{model13_head.1} parent=0 // pred_check_branch
    %151 = sbr.rel (0) target = $region21
  $region20: #{model13_head.1} parent=0 // pred_region
    _
  $region21: #{model13_head.1} parent=0 // pred_fallthru
    _
  // Predicated region
  $region22: #{model13_head.1} parent=0 // pred_check
    _
  $region23: #{model13_head.1} parent=0 // pred_check_branch
    %153 = sbr.rel (0) target = $region25
  $region24: #{model13_head.1} parent=0 // pred_region
    _
  $region25: #{model13_head.1} parent=0 // pred_fallthru
    _
  // Predicated region
  $region26: #{model13_head.1} parent=0 // pred_check
    _
  $region27: #{model13_head.1} parent=0 // pred_check_branch
    %155 = sbr.rel (0) target = $region29
  $region28: #{model13_head.1} parent=0 // pred_region
    _
  $region29: #{model13_head.1} parent=0 // pred_fallthru
    _
  // Predicated region
  $region30: #{model13_head.1} parent=0 // pred_check
    _
  $region31: #{model13_head.1} parent=0 // pred_check_branch
    %157 = sbr.rel (0) target = $region33
  $region32: #{model13_head.1} parent=0 // pred_region
    _
  $region33: #{model13_head.1} parent=0 // pred_fallthru
    _

</llo_original>
